<compile_context>
chip_gen: v7x
topology: tpu7x:2x2x1
jax: 0.10.0
libtpu: 0.0.40
codegen_flags: <defaults>
</compile_context>

<pallas_src>
import functools

import jax
import jax.numpy as jnp
from jax import lax
from jax.experimental import pallas as pl
from jax.experimental.pallas import tpu as pltpu

_NEG_INF = -1e30
_ROW_PAD_LABEL = -2147483647   # sentinels that never match real labels
_COL_PAD_LABEL = -2147483648


def _supcon_kernel(*refs, use_labels, inv_temp, loss_scale, tile_n,
                   n_padded_cols, contrast_resident):
    """Grid = (A tiles 'parallel', N tiles 'arbitrary').

    Flash-style online masked log-softmax over the N (contrast) axis with the
    self/padding handling pulled off the hot path.
    """
    if use_labels:
        (row_lab_ref, col_lab_ref, anchor_ref, contrast_ref, out_ref,
         a_sc, m_sc, l_sc, s_sc, p_sc) = refs
    else:
        (pos_ref, anchor_ref, contrast_ref, out_ref,
         a_sc, m_sc, l_sc, s_sc, p_sc) = refs

    ta = anchor_ref.shape[0]
    i = pl.program_id(0)     # anchor tile index (parallel / megacore axis)
    j = pl.program_id(1)     # contrast tile index (reduction axis)
    nj = pl.num_programs(1)

    @pl.when(j == 0)
    def _init():
        # Hoist the temperature scale out of the reduction loop: the anchor
        # tile is constant across j, so scale it once per anchor tile.
        a_sc[...] = anchor_ref[...] * inv_temp
        m_sc[...] = jnp.full_like(m_sc, _NEG_INF)
        l_sc[...] = jnp.zeros_like(l_sc)
        s_sc[...] = jnp.zeros_like(s_sc)
        p_sc[...] = jnp.zeros_like(p_sc)

    if contrast_resident:
        start = pl.multiple_of(j * tile_n, tile_n)
        c = contrast_ref[pl.ds(start, tile_n), :]
    else:
        c = contrast_ref[...]

    # MXU: (TA, D) x (TN, D)^T with f32 accumulation; logits already scaled.
    adc = lax.dot_general(a_sc[...], c,
                          dimension_numbers=(((1,), (1,)), ((), ())),
                          preferred_element_type=jnp.float32)     # (TA, TN)

    # Positives.  Padded columns can never be positives (sentinel labels for
    # the labels/SimCLR path, zero-padded mask for the explicit-mask path),
    # so no validity masking is needed here.
    if use_labels:
        posf = jnp.where(row_lab_ref[...] == col_lab_ref[...], 1.0, 0.0)
    else:
        posf = pos_ref[...].astype(jnp.float32)

    # Online softmax statistics.  The running max is over ALL columns (self
    # and padded zero columns included), exactly like the reference: the self
    # logit inv_temp * ||f||^2 >= 0 dominates the padded zeros, so the final
    # max is unchanged (and the max cancels analytically anyway).
    tile_max = jnp.max(adc, axis=1, keepdims=True)
    m_prev = m_sc[...]
    m_new = jnp.maximum(m_prev, tile_max)
    corr = jnp.exp(m_prev - m_new)
    ex = jnp.exp(adc - m_new)
    m_sc[...] = m_new

    def _accumulate(exv, posv):
        l_sc[...] = l_sc[...] * corr + jnp.sum(exv, axis=1, keepdims=True)
        s_sc[...] = s_sc[...] + jnp.sum(posv * adc, axis=1, keepdims=True)
        p_sc[...] = p_sc[...] + jnp.sum(posv, axis=1, keepdims=True)

    row0 = i * ta
    col0 = j * tile_n
    on_diag = jnp.logical_and(row0 < col0 + tile_n, col0 < row0 + ta)

    # Fast path (vast majority of tiles): no masks at all.
    @pl.when(jnp.logical_not(on_diag))
    def _fast():
        _accumulate(ex, posf)

    # Diagonal-touching tiles: exclude the self column exactly as the
    # reference's logits_mask does (both denominator and positives).
    @pl.when(on_diag)
    def _diag():
        rows = row0 + lax.broadcasted_iota(jnp.int32, (ta, tile_n), 0)
        cols = col0 + lax.broadcasted_iota(jnp.int32, (ta, tile_n), 1)
        not_self = rows != cols
        _accumulate(jnp.where(not_self, ex, 0.0),
                    jnp.where(not_self, posf, 0.0))

    @pl.when(j == nj - 1)
    def _finalize():
        m_f = m_sc[...]
        denom = l_sc[...]
        if n_padded_cols:
            # Padded contrast rows are exactly zero, so each padded column
            # contributed exactly exp(0 - m_final) to the denominator (padding
            # only lives in this last j tile).  Subtract it analytically.
            denom = denom - float(n_padded_cols) * jnp.exp(-m_f)
        # Exact division (0/0 -> NaN like the torch reference when an anchor
        # has zero positives); cheap, runs once per anchor tile.
        mean_log_prob_pos = s_sc[...] / p_sc[...] - m_f - jnp.log(denom)
        out_ref[...] = (-loss_scale) * mean_log_prob_pos


def _round_up(x, m):
    return ((x + m - 1) // m) * m


def supcon_loss(features, labels=None, mask=None, *, temperature=0.07,
                contrast_mode='all', base_temperature=0.07,
                block_a=256, block_n=512,
                max_resident_contrast_bytes=4 * 1024 * 1024,
                downcast_to_bf16=False):
    """JAX/Pallas equivalent of SupConLoss.forward. Returns a scalar.

    block_a / block_n: anchor / contrast tile sizes (defaults suit v6e/v7x;
    on v5e prefer block_a=128, block_n=256).  `downcast_to_bf16` optionally
    casts f32 features to bf16 for full-rate MXU / half DMA bytes.
    """
    if features.ndim < 3:
        raise ValueError('`features` needs to be [bsz, n_views, ...], '
                         'at least 3 dimensions are required')
    bsz, n_views = features.shape[0], features.shape[1]
    features = features.reshape(bsz, n_views, -1)
    dim = features.shape[-1]

    if labels is not None and mask is not None:
        raise ValueError('Cannot define both `labels` and `mask`')

    if downcast_to_bf16 and features.dtype == jnp.float32:
        features = features.astype(jnp.bfloat16)

    contrast_count = n_views
    # torch.cat(torch.unbind(features, dim=1), dim=0) -> view-major stacking.
    contrast_feature = jnp.transpose(features, (1, 0, 2)).reshape(
        bsz * n_views, dim)

    if contrast_mode == 'one':
        anchor_feature = features[:, 0]
        anchor_count = 1
    elif contrast_mode == 'all':
        anchor_feature = contrast_feature
        anchor_count = contrast_count
    else:
        raise ValueError('Unknown mode: {}'.format(contrast_mode))

    A = bsz * anchor_count
    N = bsz * contrast_count

    ta = min(block_a, _round_up(A, 8))            # sublane aligned
    # Keep >= 2 anchor tiles for reasonably sized problems so the "parallel"
    # grid axis can be sharded across both v7x TensorCores.
    if _round_up(A, ta) // ta == 1:
        half = _round_up((A + 1) // 2, 8)
        if half >= 64:
            ta = half
    tn = min(block_n, _round_up(N, 128))          # lane aligned
    a_pad = _round_up(A, ta)
    n_pad = _round_up(N, tn)
    d_pad = _round_up(dim, 128)                   # pad contraction to MXU width

    # Keep the feature dtype (bf16 stays bf16 for MXU + halves DMA bytes).
    anchor_p = jnp.pad(anchor_feature, ((0, a_pad - A), (0, d_pad - dim)))
    contrast_p = jnp.pad(contrast_feature, ((0, n_pad - N), (0, d_pad - dim)))

    itemsize = jnp.dtype(contrast_p.dtype).itemsize
    contrast_resident = (n_pad * d_pad * itemsize) <= max_resident_contrast_bytes
    if contrast_resident:
        # DMA the whole contrast slab once and keep it VMEM-resident (constant
        # block index); the kernel slices it per reduction step.
        contrast_spec = pl.BlockSpec((n_pad, d_pad), lambda i, j: (0, 0))
    else:
        contrast_spec = pl.BlockSpec((tn, d_pad), lambda i, j: (j, 0))

    if mask is None:
        if labels is None:
            base_labels = jnp.arange(bsz, dtype=jnp.int32)       # SimCLR == eye
        else:
            labels = jnp.asarray(labels).reshape(-1)
            if labels.shape[0] != bsz:
                raise ValueError('Num of labels does not match num of features')
            base_labels = labels.astype(jnp.int32)
        col_labels = jnp.tile(base_labels, contrast_count)                 # [N]
        row_labels = base_labels if anchor_count == 1 else col_labels      # [A]
        row_labels = jnp.pad(row_labels, (0, a_pad - A),
                             constant_values=_ROW_PAD_LABEL).reshape(a_pad, 1)
        col_labels = jnp.pad(col_labels, (0, n_pad - N),
                             constant_values=_COL_PAD_LABEL).reshape(1, n_pad)
        mask_inputs = (row_labels, col_labels)
        mask_specs = [
            pl.BlockSpec((ta, 1), lambda i, j: (i, 0)),
            pl.BlockSpec((1, tn), lambda i, j: (0, j)),
        ]
        use_labels = True
    else:
        # Uncommon explicit-mask path: tile the [bsz, bsz] mask (can be
        # asymmetric / non-binary) and stream it per tile (kept f32 to preserve
        # non-binary mask values exactly).
        base_mask = jnp.asarray(mask, dtype=jnp.float32)
        big = jnp.tile(base_mask, (anchor_count, contrast_count))
        big = jnp.pad(big, ((0, a_pad - A), (0, n_pad - N)))
        mask_inputs = (big,)
        mask_specs = [pl.BlockSpec((ta, tn), lambda i, j: (i, j))]
        use_labels = False

    grid = (a_pad // ta, n_pad // tn)
    kernel = functools.partial(
        _supcon_kernel,
        use_labels=use_labels,
        inv_temp=float(1.0 / temperature),
        loss_scale=float(temperature / base_temperature),
        tile_n=tn,
        n_padded_cols=int(n_pad - N),
        contrast_resident=contrast_resident)

    per_anchor = pl.pallas_call(
        kernel,
        out_shape=jax.ShapeDtypeStruct((a_pad, 1), jnp.float32),
        grid_spec=pltpu.PrefetchScalarGridSpec(
            num_scalar_prefetch=0,
            grid=grid,
            in_specs=mask_specs + [
                pl.BlockSpec((ta, d_pad), lambda i, j: (i, 0)),    # anchors
                contrast_spec,                                     # contrasts
            ],
            out_specs=pl.BlockSpec((ta, 1), lambda i, j: (i, 0)),
            scratch_shapes=[
                pltpu.VMEM((ta, d_pad), anchor_p.dtype),   # scaled anchor tile
                pltpu.VMEM((ta, 1), jnp.float32),          # running max m
                pltpu.VMEM((ta, 1), jnp.float32),          # denom l
                pltpu.VMEM((ta, 1), jnp.float32),          # sum(mask*logit) s
                pltpu.VMEM((ta, 1), jnp.float32),          # positive count p
            ],
        ),
        compiler_params=pltpu.CompilerParams(
            dimension_semantics=("parallel", "arbitrary"),
            vmem_limit_bytes=48 * 1024 * 1024),
    )(*mask_inputs, anchor_p, contrast_p)

    # loss.view(anchor_count, batch_size).mean() == mean over all A anchors.
    return jnp.mean(per_anchor[:A, 0])


def _supcon_loss_ref(features, labels=None, mask=None, *, temperature=0.07,
                     contrast_mode='all', base_temperature=0.07):
    """Pure-JAX reference mirroring the PyTorch forward (for validation)."""
    bsz, n_views = features.shape[0], features.shape[1]
    features = features.reshape(bsz, n_views, -1).astype(jnp.float32)
    if labels is None and mask is None:
        base_mask = jnp.eye(bsz, dtype=jnp.float32)
    elif labels is not None:
        labels = labels.reshape(-1, 1)
        base_mask = (labels == labels.T).astype(jnp.float32)
    else:
        base_mask = mask.astype(jnp.float32)
    contrast_feature = jnp.transpose(features, (1, 0, 2)).reshape(
        bsz * n_views, -1)
    if contrast_mode == 'one':
        anchor_feature, anchor_count = features[:, 0], 1
    else:
        anchor_feature, anchor_count = contrast_feature, n_views
    adc = jnp.matmul(anchor_feature, contrast_feature.T) / temperature
    logits = adc - jnp.max(adc, axis=1, keepdims=True)
    big_mask = jnp.tile(base_mask, (anchor_count, n_views))
    A = bsz * anchor_count
    logits_mask = jnp.ones_like(big_mask).at[jnp.arange(A),
                                             jnp.arange(A)].set(0.0)
    big_mask = big_mask * logits_mask
    exp_logits = jnp.exp(logits) * logits_mask
    log_prob = logits - jnp.log(jnp.sum(exp_logits, axis=1, keepdims=True))
    mean_log_prob_pos = (jnp.sum(big_mask * log_prob, axis=1)
                         / jnp.sum(big_mask, axis=1))
    loss = -(temperature / base_temperature) * mean_log_prob_pos
    return jnp.mean(loss)


if __name__ == "__main__":
    key = jax.random.PRNGKey(0)
    k1, k2, k3, k4, k5, k6 = jax.random.split(key, 6)

    # --- small case: bsz=8, n_views=2, dim=32 (L2-normalized features) ---
    bsz, n_views, dim = 8, 2, 32
    features = jax.random.normal(k1, (bsz, n_views, dim), dtype=jnp.float32)
    features = features / jnp.linalg.norm(features, axis=-1, keepdims=True)
    labels = jax.random.randint(k2, (bsz,), 0, 3)

    loss_sup = jax.block_until_ready(supcon_loss(features, labels=labels))
    assert jnp.allclose(loss_sup, _supcon_loss_ref(features, labels=labels),
                        rtol=1e-2, atol=1e-3)

    loss_simclr = jax.block_until_ready(supcon_loss(features))
    assert jnp.allclose(loss_simclr, _supcon_loss_ref(features),
                        rtol=1e-2, atol=1e-3)

    loss_one = jax.block_until_ready(
        supcon_loss(features, labels=labels, contrast_mode='one'))
    assert jnp.allclose(
        loss_one, _supcon_loss_ref(features, labels=labels,
                                   contrast_mode='one'),
        rtol=1e-2, atol=1e-3)

    custom_mask = (jax.random.uniform(k3, (bsz, bsz)) > 0.5).astype(jnp.float32)
    custom_mask = jnp.maximum(custom_mask, jnp.eye(bsz))   # >=1 positive / row
    loss_mask = jax.block_until_ready(supcon_loss(features, mask=custom_mask))
    assert jnp.allclose(loss_mask, _supcon_loss_ref(features, mask=custom_mask),
                        rtol=1e-2, atol=1e-3)

    # --- tiny-N regression: heavy lane padding, single views ---
    f3 = jax.random.normal(k6, (4, 1, 16), dtype=jnp.float32)
    f3 = f3 / jnp.linalg.norm(f3, axis=-1, keepdims=True)
    labels3 = jnp.array([0, 0, 1, 1], dtype=jnp.int32)
    loss3 = jax.block_until_ready(supcon_loss(f3, labels=labels3))
    assert jnp.allclose(loss3, _supcon_loss_ref(f3, labels=labels3),
                        rtol=1e-2, atol=1e-3)

    # --- multi-tile / padding path: exercises fast + diagonal branches ---
    bsz2, n_views2, dim2 = 80, 2, 48
    f2 = jax.random.normal(k4, (bsz2, n_views2, dim2), dtype=jnp.float32)
    f2 = f2 / jnp.linalg.norm(f2, axis=-1, keepdims=True)
    labels2 = jax.random.randint(k5, (bsz2,), 0, 7)
    loss2 = jax.block_until_ready(
        supcon_loss(f2, labels=labels2, block_a=64, block_n=128))
    assert jnp.allclose(loss2, _supcon_loss_ref(f2, labels=labels2),
                        rtol=1e-2, atol=1e-3)

    # Forced HBM-streaming (non-VMEM-resident) contrast path.
    loss2b = jax.block_until_ready(
        supcon_loss(f2, labels=labels2, block_a=64, block_n=128,
                    max_resident_contrast_bytes=0))
    assert jnp.allclose(loss2b, _supcon_loss_ref(f2, labels=labels2),
                        rtol=1e-2, atol=1e-3)

    # bf16 features through the MXU (f32 accumulation) — exercise the path.
    _ = jax.block_until_ready(
        supcon_loss(f2.astype(jnp.bfloat16), labels=labels2))

    # Optional f32 -> bf16 downcast path (halves DMA, full-rate MXU).
    _ = jax.block_until_ready(
        supcon_loss(f2, labels=labels2, downcast_to_bf16=True))

    print("KERNEL_OK")
</pallas_src>

<mosaic_0001>
module attributes {stable_mosaic.version = 11 : i64} {
  func.func @_supcon_kernel(%arg0: i32, %arg1: i32, %arg2: memref<16x1xi32, #tpu.memory_space<vmem>>, %arg3: memref<1x128xi32, #tpu.memory_space<vmem>>, %arg4: memref<16x128xf32, #tpu.memory_space<vmem>>, %arg5: memref<128x128xf32, #tpu.memory_space<vmem>>, %arg6: memref<16x1xf32, #tpu.memory_space<vmem>>, %arg7: memref<16x128xf32, #tpu.memory_space<vmem>>, %arg8: memref<16x1xf32, #tpu.memory_space<vmem>>, %arg9: memref<16x1xf32, #tpu.memory_space<vmem>>, %arg10: memref<16x1xf32, #tpu.memory_space<vmem>>, %arg11: memref<16x1xf32, #tpu.memory_space<vmem>>) attributes {dimension_semantics = [#tpu.dimension_semantics<parallel>, #tpu.dimension_semantics<arbitrary>], iteration_bounds = array<i64: 1, 1>, scalar_prefetch = 0 : i64, scratch_operands = 5 : i64, tpu.core_type = #tpu.core_type<tc>, window_params = [{transform_indices = @transform_0, window_bounds = array<i64: 16, 1>}, {transform_indices = @transform_1, window_bounds = array<i64: 1, 128>}, {transform_indices = @transform_2, window_bounds = array<i64: 16, 128>}, {pipeline_mode = #tpu.pipeline_mode<synchronous>, transform_indices = @transform_3, window_bounds = array<i64: 128, 128>}, {transform_indices = @transform_4, window_bounds = array<i64: 16, 1>}]} {
    %c0_i32 = arith.constant 0 : i32
    %0 = arith.cmpi eq, %arg1, %c0_i32 : i32
    %1 = arith.extui %0 : i1 to i32
    %c0_i32_0 = arith.constant 0 : i32
    %2 = arith.cmpi ne, %1, %c0_i32_0 : i32
    scf.if %2 {
      %c0_21 = arith.constant 0 : index
      %c0_22 = arith.constant 0 : index
      %42 = vector.load %arg4[%c0_21, %c0_22] : memref<16x128xf32, #tpu.memory_space<vmem>>, vector<16x128xf32>
      %cst_23 = arith.constant 14.2857141 : f32
      %43 = vector.broadcast %cst_23 : f32 to vector<16x128xf32>
      %44 = arith.mulf %42, %43 : vector<16x128xf32>
      %c0_24 = arith.constant 0 : index
      %c0_25 = arith.constant 0 : index
      %45 = vector.load %arg7[%c0_24, %c0_25] : memref<16x128xf32, #tpu.memory_space<vmem>>, vector<16x128xf32>
      tpu.vector_store %arg7[%c0_24, %c0_25], %44 {strides = array<i32>} : memref<16x128xf32, #tpu.memory_space<vmem>>, vector<16x128xf32>,
      %cst_26 = arith.constant -1.000000e+30 : f32
      %46 = vector.broadcast %cst_26 : f32 to vector<16x1xf32>
      %c0_27 = arith.constant 0 : index
      %c0_28 = arith.constant 0 : index
      %47 = vector.load %arg8[%c0_27, %c0_28] : memref<16x1xf32, #tpu.memory_space<vmem>>, vector<16x1xf32>
      tpu.vector_store %arg8[%c0_27, %c0_28], %46 {strides = array<i32>} : memref<16x1xf32, #tpu.memory_space<vmem>>, vector<16x1xf32>,
      %cst_29 = arith.constant 0.000000e+00 : f32
      %48 = vector.broadcast %cst_29 : f32 to vector<16x1xf32>
      %c0_30 = arith.constant 0 : index
      %c0_31 = arith.constant 0 : index
      %49 = vector.load %arg9[%c0_30, %c0_31] : memref<16x1xf32, #tpu.memory_space<vmem>>, vector<16x1xf32>
      tpu.vector_store %arg9[%c0_30, %c0_31], %48 {strides = array<i32>} : memref<16x1xf32, #tpu.memory_space<vmem>>, vector<16x1xf32>,
      %cst_32 = arith.constant 0.000000e+00 : f32
      %50 = vector.broadcast %cst_32 : f32 to vector<16x1xf32>
      %c0_33 = arith.constant 0 : index
      %c0_34 = arith.constant 0 : index
      %51 = vector.load %arg10[%c0_33, %c0_34] : memref<16x1xf32, #tpu.memory_space<vmem>>, vector<16x1xf32>
      tpu.vector_store %arg10[%c0_33, %c0_34], %50 {strides = array<i32>} : memref<16x1xf32, #tpu.memory_space<vmem>>, vector<16x1xf32>,
      %cst_35 = arith.constant 0.000000e+00 : f32
      %52 = vector.broadcast %cst_35 : f32 to vector<16x1xf32>
      %c0_36 = arith.constant 0 : index
      %c0_37 = arith.constant 0 : index
      %53 = vector.load %arg11[%c0_36, %c0_37] : memref<16x1xf32, #tpu.memory_space<vmem>>, vector<16x1xf32>
      tpu.vector_store %arg11[%c0_36, %c0_37], %52 {strides = array<i32>} : memref<16x1xf32, #tpu.memory_space<vmem>>, vector<16x1xf32>,
    } else {
    }
    %c128_i32 = arith.constant 128 : i32
    %3 = arith.muli %arg1, %c128_i32 : i32
    %4 = tpu.assume_multiple %3, 128 : i32
    %5 = arith.index_cast %4 : i32 to index
    %c0 = arith.constant 0 : index
    %6 = vector.load %arg5[%5, %c0] : memref<128x128xf32, #tpu.memory_space<vmem>>, vector<128x128xf32>
    %c0_1 = arith.constant 0 : index
    %c0_2 = arith.constant 0 : index
    %7 = vector.load %arg7[%c0_1, %c0_2] : memref<16x128xf32, #tpu.memory_space<vmem>>, vector<16x128xf32>
    %cst = arith.constant dense<0.000000e+00> : vector<16x128xf32>
    %8 = tpu.matmul %7, %6, %cst {dimension_numbers = #tpu.dot_dimension_numbers<[1], [1], [0], [0], [0, 0, 1, 0], [], []>} : vector<16x128xf32>, vector<128x128xf32>, vector<16x128xf32> -> vector<16x128xf32>
    %c0_3 = arith.constant 0 : index
    %c0_4 = arith.constant 0 : index
    %9 = vector.load %arg2[%c0_3, %c0_4] : memref<16x1xi32, #tpu.memory_space<vmem>>, vector<16x1xi32>
    %c0_5 = arith.constant 0 : index
    %c0_6 = arith.constant 0 : index
    %10 = vector.load %arg3[%c0_5, %c0_6] : memref<1x128xi32, #tpu.memory_space<vmem>>, vector<1x128xi32>
    %11 = vector.broadcast %9 : vector<16x1xi32> to vector<16x128xi32>
    %12 = vector.broadcast %10 : vector<1x128xi32> to vector<16x128xi32>
    %13 = arith.cmpi eq, %11, %12 : vector<16x128xi32>
    %cst_7 = arith.constant 1.000000e+00 : f32
    %cst_8 = arith.constant 0.000000e+00 : f32
    %14 = vector.broadcast %cst_7 : f32 to vector<16x128xf32>
    %15 = vector.broadcast %cst_8 : f32 to vector<16x128xf32>
    %16 = arith.select %13, %14, %15 : vector<16x128xi1>, vector<16x128xf32>
    %cst_9 = arith.constant dense<0xFF800000> : vector<16xf32>
    %17 = vector.multi_reduction <maximumf>, %8, %cst_9 [1] : vector<16x128xf32> to vector<16xf32>
    %18 = vector.shape_cast %17 : vector<16xf32> to vector<16x1xf32>
    %c0_10 = arith.constant 0 : index
    %c0_11 = arith.constant 0 : index
    %19 = vector.load %arg8[%c0_10, %c0_11] : memref<16x1xf32, #tpu.memory_space<vmem>>, vector<16x1xf32>
    %20 = arith.maximumf %19, %18 : vector<16x1xf32>
    %21 = arith.subf %19, %20 : vector<16x1xf32>
    %22 = math.exp %21 : vector<16x1xf32>
    %23 = vector.broadcast %20 : vector<16x1xf32> to vector<16x128xf32>
    %24 = arith.subf %8, %23 : vector<16x128xf32>
    %25 = math.exp %24 : vector<16x128xf32>
    %c0_12 = arith.constant 0 : index
    %c0_13 = arith.constant 0 : index
    %26 = vector.load %arg8[%c0_12, %c0_13] : memref<16x1xf32, #tpu.memory_space<vmem>>, vector<16x1xf32>
    tpu.vector_store %arg8[%c0_12, %c0_13], %20 {strides = array<i32>} : memref<16x1xf32, #tpu.memory_space<vmem>>, vector<16x1xf32>,
    %c16_i32 = arith.constant 16 : i32
    %27 = arith.muli %arg0, %c16_i32 : i32
    %c128_i32_14 = arith.constant 128 : i32
    %28 = arith.muli %arg1, %c128_i32_14 : i32
    %c128_i32_15 = arith.constant 128 : i32
    %29 = arith.addi %28, %c128_i32_15 : i32
    %30 = arith.cmpi slt, %27, %29 : i32
    %c16_i32_16 = arith.constant 16 : i32
    %31 = arith.addi %27, %c16_i32_16 : i32
    %32 = arith.cmpi slt, %28, %31 : i32
    %33 = arith.andi %30, %32 : i1
    %true = arith.constant true
    %34 = arith.xori %33, %true : i1
    %35 = arith.extui %34 : i1 to i32
    %c0_i32_17 = arith.constant 0 : i32
    %36 = arith.cmpi ne, %35, %c0_i32_17 : i32
    scf.if %36 {
      %c0_21 = arith.constant 0 : index
      %c0_22 = arith.constant 0 : index
      %42 = vector.load %arg9[%c0_21, %c0_22] : memref<16x1xf32, #tpu.memory_space<vmem>>, vector<16x1xf32>
      %43 = arith.mulf %42, %22 : vector<16x1xf32>
      %cst_23 = arith.constant dense<0.000000e+00> : vector<16xf32>
      %44 = vector.multi_reduction <add>, %25, %cst_23 [1] : vector<16x128xf32> to vector<16xf32>
      %45 = vector.shape_cast %44 : vector<16xf32> to vector<16x1xf32>
      %46 = arith.addf %43, %45 : vector<16x1xf32>
      %c0_24 = arith.constant 0 : index
      %c0_25 = arith.constant 0 : index
      %47 = vector.load %arg9[%c0_24, %c0_25] : memref<16x1xf32, #tpu.memory_space<vmem>>, vector<16x1xf32>
      tpu.vector_store %arg9[%c0_24, %c0_25], %46 {strides = array<i32>} : memref<16x1xf32, #tpu.memory_space<vmem>>, vector<16x1xf32>,
      %c0_26 = arith.constant 0 : index
      %c0_27 = arith.constant 0 : index
      %48 = vector.load %arg10[%c0_26, %c0_27] : memref<16x1xf32, #tpu.memory_space<vmem>>, vector<16x1xf32>
      %49 = arith.mulf %16, %8 : vector<16x128xf32>
      %cst_28 = arith.constant dense<0.000000e+00> : vector<16xf32>
      %50 = vector.multi_reduction <add>, %49, %cst_28 [1] : vector<16x128xf32> to vector<16xf32>
      %51 = vector.shape_cast %50 : vector<16xf32> to vector<16x1xf32>
      %52 = arith.addf %48, %51 : vector<16x1xf32>
      %c0_29 = arith.constant 0 : index
      %c0_30 = arith.constant 0 : index
      %53 = vector.load %arg10[%c0_29, %c0_30] : memref<16x1xf32, #tpu.memory_space<vmem>>, vector<16x1xf32>
      tpu.vector_store %arg10[%c0_29, %c0_30], %52 {strides = array<i32>} : memref<16x1xf32, #tpu.memory_space<vmem>>, vector<16x1xf32>,
      %c0_31 = arith.constant 0 : index
      %c0_32 = arith.constant 0 : index
      %54 = vector.load %arg11[%c0_31, %c0_32] : memref<16x1xf32, #tpu.memory_space<vmem>>, vector<16x1xf32>
      %cst_33 = arith.constant dense<0.000000e+00> : vector<16xf32>
      %55 = vector.multi_reduction <add>, %16, %cst_33 [1] : vector<16x128xf32> to vector<16xf32>
      %56 = vector.shape_cast %55 : vector<16xf32> to vector<16x1xf32>
      %57 = arith.addf %54, %56 : vector<16x1xf32>
      %c0_34 = arith.constant 0 : index
      %c0_35 = arith.constant 0 : index
      %58 = vector.load %arg11[%c0_34, %c0_35] : memref<16x1xf32, #tpu.memory_space<vmem>>, vector<16x1xf32>
      tpu.vector_store %arg11[%c0_34, %c0_35], %57 {strides = array<i32>} : memref<16x1xf32, #tpu.memory_space<vmem>>, vector<16x1xf32>,
    } else {
    }
    %37 = arith.extui %33 : i1 to i32
    %c0_i32_18 = arith.constant 0 : i32
    %38 = arith.cmpi ne, %37, %c0_i32_18 : i32
    scf.if %38 {
      %42 = tpu.iota {dimensions = array<i32: 0>} : vector<16x128xi32>
      %43 = vector.broadcast %27 : i32 to vector<16x128xi32>
      %44 = arith.addi %43, %42 : vector<16x128xi32>
      %45 = tpu.iota {dimensions = array<i32: 1>} : vector<16x128xi32>
      %46 = vector.broadcast %28 : i32 to vector<16x128xi32>
      %47 = arith.addi %46, %45 : vector<16x128xi32>
      %48 = arith.cmpi ne, %44, %47 : vector<16x128xi32>
      %cst_21 = arith.constant 0.000000e+00 : f32
      %49 = vector.broadcast %cst_21 : f32 to vector<16x128xf32>
      %50 = arith.select %48, %25, %49 : vector<16x128xi1>, vector<16x128xf32>
      %cst_22 = arith.constant 0.000000e+00 : f32
      %51 = vector.broadcast %cst_22 : f32 to vector<16x128xf32>
      %52 = arith.select %48, %16, %51 : vector<16x128xi1>, vector<16x128xf32>
      %c0_23 = arith.constant 0 : index
      %c0_24 = arith.constant 0 : index
      %53 = vector.load %arg9[%c0_23, %c0_24] : memref<16x1xf32, #tpu.memory_space<vmem>>, vector<16x1xf32>
      %54 = arith.mulf %53, %22 : vector<16x1xf32>
      %cst_25 = arith.constant dense<0.000000e+00> : vector<16xf32>
      %55 = vector.multi_reduction <add>, %50, %cst_25 [1] : vector<16x128xf32> to vector<16xf32>
      %56 = vector.shape_cast %55 : vector<16xf32> to vector<16x1xf32>
      %57 = arith.addf %54, %56 : vector<16x1xf32>
      %c0_26 = arith.constant 0 : index
      %c0_27 = arith.constant 0 : index
      %58 = vector.load %arg9[%c0_26, %c0_27] : memref<16x1xf32, #tpu.memory_space<vmem>>, vector<16x1xf32>
      tpu.vector_store %arg9[%c0_26, %c0_27], %57 {strides = array<i32>} : memref<16x1xf32, #tpu.memory_space<vmem>>, vector<16x1xf32>,
      %c0_28 = arith.constant 0 : index
      %c0_29 = arith.constant 0 : index
      %59 = vector.load %arg10[%c0_28, %c0_29] : memref<16x1xf32, #tpu.memory_space<vmem>>, vector<16x1xf32>
      %60 = arith.mulf %52, %8 : vector<16x128xf32>
      %cst_30 = arith.constant dense<0.000000e+00> : vector<16xf32>
      %61 = vector.multi_reduction <add>, %60, %cst_30 [1] : vector<16x128xf32> to vector<16xf32>
      %62 = vector.shape_cast %61 : vector<16xf32> to vector<16x1xf32>
      %63 = arith.addf %59, %62 : vector<16x1xf32>
      %c0_31 = arith.constant 0 : index
      %c0_32 = arith.constant 0 : index
      %64 = vector.load %arg10[%c0_31, %c0_32] : memref<16x1xf32, #tpu.memory_space<vmem>>, vector<16x1xf32>
      tpu.vector_store %arg10[%c0_31, %c0_32], %63 {strides = array<i32>} : memref<16x1xf32, #tpu.memory_space<vmem>>, vector<16x1xf32>,
      %c0_33 = arith.constant 0 : index
      %c0_34 = arith.constant 0 : index
      %65 = vector.load %arg11[%c0_33, %c0_34] : memref<16x1xf32, #tpu.memory_space<vmem>>, vector<16x1xf32>
      %cst_35 = arith.constant dense<0.000000e+00> : vector<16xf32>
      %66 = vector.multi_reduction <add>, %52, %cst_35 [1] : vector<16x128xf32> to vector<16xf32>
      %67 = vector.shape_cast %66 : vector<16xf32> to vector<16x1xf32>
      %68 = arith.addf %65, %67 : vector<16x1xf32>
      %c0_36 = arith.constant 0 : index
      %c0_37 = arith.constant 0 : index
      %69 = vector.load %arg11[%c0_36, %c0_37] : memref<16x1xf32, #tpu.memory_space<vmem>>, vector<16x1xf32>
      tpu.vector_store %arg11[%c0_36, %c0_37], %68 {strides = array<i32>} : memref<16x1xf32, #tpu.memory_space<vmem>>, vector<16x1xf32>,
    } else {
    }
    %c0_i32_19 = arith.constant 0 : i32
    %39 = arith.cmpi eq, %arg1, %c0_i32_19 : i32
    %40 = arith.extui %39 : i1 to i32
    %c0_i32_20 = arith.constant 0 : i32
    %41 = arith.cmpi ne, %40, %c0_i32_20 : i32
    scf.if %41 {
      %c0_21 = arith.constant 0 : index
      %c0_22 = arith.constant 0 : index
      %42 = vector.load %arg8[%c0_21, %c0_22] : memref<16x1xf32, #tpu.memory_space<vmem>>, vector<16x1xf32>
      %c0_23 = arith.constant 0 : index
      %c0_24 = arith.constant 0 : index
      %43 = vector.load %arg9[%c0_23, %c0_24] : memref<16x1xf32, #tpu.memory_space<vmem>>, vector<16x1xf32>
      %cst_25 = arith.constant 0.000000e+00 : f32
      %44 = vector.broadcast %cst_25 : f32 to vector<16x1xf32>
      %45 = arith.subf %44, %42 : vector<16x1xf32>
      %46 = math.exp %45 : vector<16x1xf32>
      %cst_26 = arith.constant 1.120000e+02 : f32
      %47 = vector.broadcast %cst_26 : f32 to vector<16x1xf32>
      %48 = arith.mulf %47, %46 : vector<16x1xf32>
      %49 = arith.subf %43, %48 : vector<16x1xf32>
      %c0_27 = arith.constant 0 : index
      %c0_28 = arith.constant 0 : index
      %50 = vector.load %arg10[%c0_27, %c0_28] : memref<16x1xf32, #tpu.memory_space<vmem>>, vector<16x1xf32>
      %c0_29 = arith.constant 0 : index
      %c0_30 = arith.constant 0 : index
      %51 = vector.load %arg11[%c0_29, %c0_30] : memref<16x1xf32, #tpu.memory_space<vmem>>, vector<16x1xf32>
      %52 = arith.divf %50, %51 : vector<16x1xf32>
      %53 = arith.subf %52, %42 : vector<16x1xf32>
      %54 = math.log %49 : vector<16x1xf32>
      %55 = arith.subf %53, %54 : vector<16x1xf32>
      %cst_31 = arith.constant -1.000000e+00 : f32
      %56 = vector.broadcast %cst_31 : f32 to vector<16x1xf32>
      %57 = arith.mulf %56, %55 : vector<16x1xf32>
      %c0_32 = arith.constant 0 : index
      %c0_33 = arith.constant 0 : index
      %58 = vector.load %arg6[%c0_32, %c0_33] : memref<16x1xf32, #tpu.memory_space<vmem>>, vector<16x1xf32>
      tpu.vector_store %arg6[%c0_32, %c0_33], %57 {strides = array<i32>} : memref<16x1xf32, #tpu.memory_space<vmem>>, vector<16x1xf32>,
    } else {
    }
    return
  }
  func.func @transform_0(%arg0: i32, %arg1: i32) -> (i32, i32) {
    %c0_i32 = arith.constant 0 : i32
    %c0_i32_0 = arith.constant 0 : i32
    return %arg0, %c0_i32 : i32, i32
  }
  func.func @transform_1(%arg0: i32, %arg1: i32) -> (i32, i32) {
    %c0_i32 = arith.constant 0 : i32
    %c0_i32_0 = arith.constant 0 : i32
    return %c0_i32, %arg1 : i32, i32
  }
  func.func @transform_2(%arg0: i32, %arg1: i32) -> (i32, i32) {
    %c0_i32 = arith.constant 0 : i32
    %c0_i32_0 = arith.constant 0 : i32
    return %arg0, %c0_i32 : i32, i32
  }
  func.func @transform_3(%arg0: i32, %arg1: i32) -> (i32, i32) {
    %c0_i32 = arith.constant 0 : i32
    %c0_i32_0 = arith.constant 0 : i32
    %c0_i32_1 = arith.constant 0 : i32
    return %c0_i32, %c0_i32_0 : i32, i32
  }
  func.func @transform_4(%arg0: i32, %arg1: i32) -> (i32, i32) {
    %c0_i32 = arith.constant 0 : i32
    %c0_i32_0 = arith.constant 0 : i32
    return %arg0, %c0_i32 : i32, i32
  }
}

</mosaic_0001>

<llo_original>
// kernel: tpu_custom_call.1
$region0: #{tpu_custom_call.1}
  #allocation0 [shape = 'u32[]', space=smem, size = 0x4, offset = 0x4, fixed_abs, tag = 'smem constant byte address 0x4 - core index']
  #allocation1 [shape = 'u32[144,128]{1,0:T(1,128)}', space=vmem, size = 0x12000, scoped, tag = 'internal scratch']
  #allocation2 [shape = 'f32[16,128]{1,0:T(8,128)}', space=vmem, size = 0x2000, scoped, tag = 'scratch operand']
  #allocation3 [shape = 'f32[16,1]{1,0:T(8,128)}', space=vmem, size = 0x2000, scoped, tag = 'scratch operand']
  #allocation4 [shape = 'f32[16,1]{1,0:T(8,128)}', space=vmem, size = 0x2000, scoped, tag = 'scratch operand']
  #allocation5 [shape = 'f32[16,1]{1,0:T(8,128)}', space=vmem, size = 0x2000, scoped, tag = 'scratch operand']
  #allocation6 [shape = 'f32[16,1]{1,0:T(8,128)}', space=vmem, size = 0x2000, scoped, tag = 'scratch operand']
  %s0 = inlined_call_operand.vmem [shape: s32[16,1], index: 0, kind: input, shape index: {}]
  %s1 = inlined_call_operand.vmem [shape: s32[1,128], index: 1, kind: input, shape index: {}]
  %s2 = inlined_call_operand.vmem [shape: f32[16,128], index: 2, kind: input, shape index: {}]
  %s3 = inlined_call_operand.hbm [shape: f32[128,128], index: 3, kind: input, shape index: {}]
  %s4 = inlined_call_operand.vmem [shape: f32[16,1], index: 4, kind: output, shape index: {}]
  %s5 = sld [smem:[#allocation0]]
  $region46: #{tpu_custom_call.1} parent=0
    _
  %s7 = ssub.s32 1, %s5
  %s8 = scalar_select 0, %s7, %s5
  $region1: #{tpu_custom_call.1} parent=0
    #allocation7 [shape = 'u8[65536]{0}', space=vmem, size = 0x10000, scoped, tag = 'input window, operand 3, single buffered']
    #allocation8 [shape = 's32[1]{0}', space=sflag, size = 0x4, scoped, tag = 'scoped memory for tpu_custom_call.1']
    %9 = vsyncpa [#allocation8], 0
    // Predicated region
    $region2: #{tpu_custom_call.1} parent=1 // pred_check
      _
    $region3: #{tpu_custom_call.1} parent=1 // pred_check_branch
      %11 = sbr.rel (0) target = $region5
    $region4: #{tpu_custom_call.1} parent=1 // pred_region
      _
    $region5: #{tpu_custom_call.1} parent=1 // pred_fallthru
      _
    // Predicated region
    $region6: #{tpu_custom_call.1} parent=1 // pred_check
      _
    $region7: #{tpu_custom_call.1} parent=1 // pred_check_branch
      %13 = sbr.rel (0) target = $region9
    $region8: #{tpu_custom_call.1} parent=1 // pred_region
      _
    $region9: #{tpu_custom_call.1} parent=1 // pred_fallthru
      _
    // Predicated region
    $region10: #{tpu_custom_call.1} parent=1 // pred_check
      _
    $region11: #{tpu_custom_call.1} parent=1 // pred_check_branch
      %15 = sbr.rel (0) target = $region13
    $region12: #{tpu_custom_call.1} parent=1 // pred_region
      _
    $region13: #{tpu_custom_call.1} parent=1 // pred_fallthru
      _
    // Predicated region
    $region14: #{tpu_custom_call.1} parent=1 // pred_check
      _
    $region15: #{tpu_custom_call.1} parent=1 // pred_check_branch
      %17 = sbr.rel (0) target = $region17
    $region16: #{tpu_custom_call.1} parent=1 // pred_region
      %s19 = ssub.s32 2048, 2048
      %20 = vsyncadd [#allocation8], %s19
      %s21 = sshll.u32 [#allocation7], 4
      %s22 = int_to_ptr.vmem [resolvable:$true] %s21
      %27 = dma.hbm_to_vmem [thread:$0]  %s3, 2048, %s22, [#allocation8], 128, 128, 8
    $region17: #{tpu_custom_call.1} parent=1 // pred_fallthru
      _
    // Predicated region
    $region18: #{tpu_custom_call.1} parent=1 // pred_check
      _
    $region19: #{tpu_custom_call.1} parent=1 // pred_check_branch
      %29 = sbr.rel (0) target = $region21
    $region20: #{tpu_custom_call.1} parent=1 // pred_region
      %30 = dma.done [#allocation8], 2048
    $region21: #{tpu_custom_call.1} parent=1 // pred_fallthru
      _
    %p31 = scmp.eq.s32.totalorder 0, 0
    // Predicated region
    $region22: #{tpu_custom_call.1} parent=1 // pred_check
      %p32 = pneg %p31
    $region23: #{tpu_custom_call.1} parent=1 // pred_check_branch
      %34 = sbr.rel (%p32) target = $region25
    $region24: #{tpu_custom_call.1} parent=1 // pred_region
      %v35 = vld [vmem:[%s2] sm:$0xff]
      %v36 = vld [vmem:[%s2 + $0x8] sm:$0xff]
      %v37 = vmul.f32 %v35, 14.285714
      %v38 = vmul.f32 %v36, 14.285714
      %39 = vst [vmem:[#allocation2] sm:$0xff] %v37
      %40 = vst [vmem:[#allocation2 + $0x8] sm:$0xff] %v38
      %vm41 = vcmask 7168
      %42 = vst.msk [vmem:[#allocation3] sm:$0xff] %vm41, -1e+30
      %43 = vst.msk [vmem:[#allocation3 + $0x8] sm:$0xff] %vm41, -1e+30
      %44 = vst.msk [vmem:[#allocation4] sm:$0xff] %vm41, 0.0
      %45 = vst.msk [vmem:[#allocation4 + $0x8] sm:$0xff] %vm41, 0.0
      %46 = vst.msk [vmem:[#allocation5] sm:$0xff] %vm41, 0.0
      %47 = vst.msk [vmem:[#allocation5 + $0x8] sm:$0xff] %vm41, 0.0
      %48 = vst.msk [vmem:[#allocation6] sm:$0xff] %vm41, 0.0
      %49 = vst.msk [vmem:[#allocation6 + $0x8] sm:$0xff] %vm41, 0.0
    $region25: #{tpu_custom_call.1} parent=1 // pred_fallthru
      _
    %s50 = smul.u32 0, 128
    %s51 = scalar_lea.vmem [#allocation7], %s50
    %v52 = vld [vmem:[%s51] sm:$0xff]
    %v53 = vld [vmem:[%s51 + $0x8] sm:$0xff]
    %v54 = vld [vmem:[%s51 + $0x10] sm:$0xff]
    %v55 = vld [vmem:[%s51 + $0x18] sm:$0xff]
    %v56 = vld [vmem:[%s51 + $0x20] sm:$0xff]
    %v57 = vld [vmem:[%s51 + $0x28] sm:$0xff]
    %v58 = vld [vmem:[%s51 + $0x30] sm:$0xff]
    %v59 = vld [vmem:[%s51 + $0x38] sm:$0xff]
    %v60 = vld [vmem:[%s51 + $0x40] sm:$0xff]
    %v61 = vld [vmem:[%s51 + $0x48] sm:$0xff]
    %v62 = vld [vmem:[%s51 + $0x50] sm:$0xff]
    %v63 = vld [vmem:[%s51 + $0x58] sm:$0xff]
    %v64 = vld [vmem:[%s51 + $0x60] sm:$0xff]
    %v65 = vld [vmem:[%s51 + $0x68] sm:$0xff]
    %v66 = vld [vmem:[%s51 + $0x70] sm:$0xff]
    %v67 = vld [vmem:[%s51 + $0x78] sm:$0xff]
    %v68 = vld [vmem:[#allocation2] sm:$0xff]
    %v69 = vld [vmem:[#allocation2 + $0x8] sm:$0xff]
    %70 = vmatprep.subr.mxu0 0.0
    %71 = vmatpush1.xpose.msra.mxu0 %v52
    %72 = vmatprep.subr.mxu0 0.0
    %73 = vmatpush1.xpose.msra.mxu0 %v53
    %74 = vmatprep.subr.mxu0 0.0
    %75 = vmatpush1.xpose.msra.mxu0 %v54
    %76 = vmatprep.subr.mxu0 0.0
    %77 = vmatpush1.xpose.msra.mxu0 %v55
    %78 = vmatprep.subr.mxu0 0.0
    %79 = vmatpush1.xpose.msra.mxu0 %v56
    %80 = vmatprep.subr.mxu0 0.0
    %81 = vmatpush1.xpose.msra.mxu0 %v57
    %82 = vmatprep.subr.mxu0 0.0
    %83 = vmatpush1.xpose.msra.mxu0 %v58
    %84 = vmatprep.subr.mxu0 0.0
    %85 = vmatpush1.xpose.msra.mxu0 %v59
    %86 = vmatprep.subr.mxu0 0.0
    %87 = vmatpush1.xpose.msra.mxu0 %v60
    %88 = vmatprep.subr.mxu0 0.0
    %89 = vmatpush1.xpose.msra.mxu0 %v61
    %90 = vmatprep.subr.mxu0 0.0
    %91 = vmatpush1.xpose.msra.mxu0 %v62
    %92 = vmatprep.subr.mxu0 0.0
    %93 = vmatpush1.xpose.msra.mxu0 %v63
    %94 = vmatprep.subr.mxu0 0.0
    %95 = vmatpush1.xpose.msra.mxu0 %v64
    %96 = vmatprep.subr.mxu0 0.0
    %97 = vmatpush1.xpose.msra.mxu0 %v65
    %98 = vmatprep.subr.mxu0 0.0
    %99 = vmatpush1.xpose.msra.mxu0 %v66
    %100 = vmatprep.subr.mxu0 0.0
    %101 = vmatpush1.xpose.msra.mxu0 %v67
    %102 = vmatprep.subr.mxu0 0.0
    %103 = vmatpush1.xpose.msra.mxu0 0.0
    %104 = vmatprep.subr.mxu0 0.0
    %105 = vmatpush1.xpose.msra.mxu0 0.0
    %106 = vmatprep.subr.mxu0 0.0
    %107 = vmatpush1.xpose.msra.mxu0 0.0
    %108 = vmatprep.subr.mxu0 0.0
    %109 = vmatpush1.xpose.msra.mxu0 0.0
    %110 = vmatprep.subr.mxu0 0.0
    %111 = vmatpush1.xpose.msra.mxu0 0.0
    %112 = vmatprep.subr.mxu0 0.0
    %113 = vmatpush1.xpose.msra.mxu0 0.0
    %114 = vmatprep.subr.mxu0 0.0
    %115 = vmatpush1.xpose.msra.mxu0 0.0
    %116 = vmatprep.subr.mxu0 0.0
    %117 = vmatpush1.xpose.msra.mxu0 0.0
    %118 = vmatprep.subr.mxu0 0.0
    %119 = vmatpush1.xpose.msra.mxu0 0.0
    %120 = vmatprep.subr.mxu0 0.0
    %121 = vmatpush1.xpose.msra.mxu0 0.0
    %122 = vmatprep.subr.mxu0 0.0
    %123 = vmatpush1.xpose.msra.mxu0 0.0
    %124 = vmatprep.subr.mxu0 0.0
    %125 = vmatpush1.xpose.msra.mxu0 0.0
    %126 = vmatprep.subr.mxu0 0.0
    %127 = vmatpush1.xpose.msra.mxu0 0.0
    %128 = vmatprep.subr.mxu0 0.0
    %129 = vmatpush1.xpose.msra.mxu0 0.0
    %130 = vmatprep.subr.mxu0 0.0
    %131 = vmatpush1.xpose.msra.mxu0 0.0
    %132 = vmatprep.subr.mxu0 0.0
    %133 = vmatpush1.xpose.msra.mxu0 0.0
    %134 = vmatprep.mubr.f32.mxu0 0.0
    %135 = vmatmul.mubr.f32.gmra.mrb[0].mxu0 %v68
    %v136 = vpop.f32.mrb[0].mxu0
    %v137 = vadd.f32 0.0, %v136
    %v138 = vpop.f32.mrb[0].mxu0
    %139 = vmatprep.mubr.f32.mxu0 0.0
    %140 = vmatmul.mubr.f32.gmra.mrb[0].mxu0 %v69
    %v141 = vpop.f32.mrb[0].mxu0
    %v142 = vadd.f32 0.0, %v141
    %v143 = vpop.f32.mrb[0].mxu0
    %144 = vdwg.mxu0
    %v145 = vld [vmem:[%s0] sm:$0xff]
    %v146 = vld [vmem:[%s0 + $0x8] sm:$0xff]
    %v147 = vld [vmem:[%s1] sm:$0x1]
    %148 = vset.pattern.permute.xlu0 0
    %149 = vperm.xlu0 %148, %v145
    %v150 = vpop.permute.xlu0 %149
    %151 = vset.pattern.permute.xlu0 0
    %152 = vperm.xlu0 %151, %v146
    %v153 = vpop.permute.xlu0 %152
    %v154 = vlaneseq
    %v155 = vshrl.u32 %v154, 7
    %v156 = vsub.s32 0, %v155
    %v157 = vrot.slane %v147, %v156
    %vm158 = vcmp.eq.s32.totalorder %v150, %v157
    %vm159 = vcmp.eq.s32.totalorder %v153, %v157
    %v160 = vsel %vm158, 1.0, 0.0
    %v161 = vsel %vm159, 1.0, 0.0
    %162 = vmax.xlane.f32.xlu0 %v137
    %v163 = vpop.xlane.xlu0 %162
    %164 = vmax.xlane.f32.xlu0 %v142
    %v165 = vpop.xlane.xlu0 %164
    %v166 = vld [vmem:[#allocation3] sm:$0xff]
    %v167 = vld [vmem:[#allocation3 + $0x8] sm:$0xff]
    %v168 = vmax.f32 %v166, %v163
    %v169 = vmax.f32 %v167, %v165
    %v170 = vsub.f32 %v166, %v168
    %v171 = vsub.f32 %v167, %v169
    %v172 = vmul.f32 %v170, 1.442695
    %v173 = vpow.pop %v172
    %v174 = vmul.f32 %v171, 1.442695
    %v175 = vpow.pop %v174
    %177 = vset.pattern.permute.xlu0 0
    %178 = vperm.xlu0 %177, %v168
    %v179 = vpop.permute.xlu0 %178
    %182 = vset.pattern.permute.xlu0 0
    %183 = vperm.xlu0 %182, %v169
    %v184 = vpop.permute.xlu0 %183
    %v186 = vsub.f32 %v137, %v179
    %v187 = vsub.f32 %v142, %v184
    %v188 = vmul.f32 %v186, 1.442695
    %v189 = vpow.pop %v188
    %v190 = vmul.f32 %v187, 1.442695
    %v191 = vpow.pop %v190
    %vm192 = vcmask 7168
    %193 = vst.msk [vmem:[#allocation3] sm:$0xff] %vm192, %v168
    %194 = vst.msk [vmem:[#allocation3 + $0x8] sm:$0xff] %vm192, %v169
    %s195 = smul.u32 0, 16
    %s196 = sadd.s32 %s50, 128
    %p197 = scmp.lt.s32.totalorder %s195, %s196
    %s198 = sadd.s32 %s195, 16
    %p199 = scmp.lt.s32.totalorder %s50, %s198
    %p200 = pnand %p197, %p199
    %p201 = pneg %p200
    // Predicated region
    $region26: #{tpu_custom_call.1} parent=1 // pred_check
      _
    $region27: #{tpu_custom_call.1} parent=1 // pred_check_branch
      %203 = sbr.rel (%p200) target = $region29
    $region28: #{tpu_custom_call.1} parent=1 // pred_region
      %v204 = vlaneseq
      %v205 = vshrl.u32 %v204, 7
      %v206 = vadd.s32 %v205, 8
      %v207 = vstv %s195
      %v208 = vadd.s32 %v207, %v205
      %v209 = vadd.s32 %v207, %v206
      %v210 = vlaneseq
      %v211 = vand.u32 %v210, 127
      %v212 = vstv %s50
      %v213 = vadd.s32 %v212, %v211
      %vm214 = vcmp.ne.s32.totalorder %v208, %v213
      %vm215 = vcmp.ne.s32.totalorder %v209, %v213
      %v216 = vsel %vm214, %v189, 0.0
      %v217 = vsel %vm215, %v191, 0.0
      %v218 = vsel %vm214, %v160, 0.0
      %v219 = vsel %vm215, %v161, 0.0
      %v220 = vld [vmem:[#allocation4] sm:$0xff]
      %v221 = vld [vmem:[#allocation4 + $0x8] sm:$0xff]
      %v222 = vmul.f32 %v220, %v173
      %v223 = vmul.f32 %v221, %v175
      %224 = vadd.xlane.f32.xlu0 %v216
      %v225 = vpop.xlane.xlu0 %224
      %226 = vadd.xlane.f32.xlu0 %v217
      %v227 = vpop.xlane.xlu0 %226
      %v228 = vadd.f32 %v222, %v225
      %v229 = vadd.f32 %v223, %v227
      %230 = vst.msk [vmem:[#allocation4] sm:$0xff] %vm192, %v228
      %231 = vst.msk [vmem:[#allocation4 + $0x8] sm:$0xff] %vm192, %v229
      %v232 = vld [vmem:[#allocation5] sm:$0xff]
      %v233 = vld [vmem:[#allocation5 + $0x8] sm:$0xff]
      %v234 = vmul.f32 %v218, %v137
      %v235 = vmul.f32 %v219, %v142
      %236 = vadd.xlane.f32.xlu0 %v234
      %v237 = vpop.xlane.xlu0 %236
      %238 = vadd.xlane.f32.xlu0 %v235
      %v239 = vpop.xlane.xlu0 %238
      %v240 = vadd.f32 %v232, %v237
      %v241 = vadd.f32 %v233, %v239
      %242 = vst.msk [vmem:[#allocation5] sm:$0xff] %vm192, %v240
      %243 = vst.msk [vmem:[#allocation5 + $0x8] sm:$0xff] %vm192, %v241
      %v244 = vld [vmem:[#allocation6] sm:$0xff]
      %v245 = vld [vmem:[#allocation6 + $0x8] sm:$0xff]
      %246 = vadd.xlane.f32.xlu0 %v218
      %v247 = vpop.xlane.xlu0 %246
      %248 = vadd.xlane.f32.xlu0 %v219
      %v249 = vpop.xlane.xlu0 %248
      %v250 = vadd.f32 %v244, %v247
      %v251 = vadd.f32 %v245, %v249
      %252 = vst.msk [vmem:[#allocation6] sm:$0xff] %vm192, %v250
      %253 = vst.msk [vmem:[#allocation6 + $0x8] sm:$0xff] %vm192, %v251
    $region29: #{tpu_custom_call.1} parent=1 // pred_fallthru
      _
    // Predicated region
    $region30: #{tpu_custom_call.1} parent=1 // pred_check
      %p254 = pneg %p200
    $region31: #{tpu_custom_call.1} parent=1 // pred_check_branch
      %256 = sbr.rel (%p254) target = $region33
    $region32: #{tpu_custom_call.1} parent=1 // pred_region
      %v257 = vld [vmem:[#allocation4] sm:$0xff]
      %v258 = vld [vmem:[#allocation4 + $0x8] sm:$0xff]
      %v259 = vmul.f32 %v257, %v173
      %v260 = vmul.f32 %v258, %v175
      %261 = vadd.xlane.f32.xlu0 %v189
      %v262 = vpop.xlane.xlu0 %261
      %263 = vadd.xlane.f32.xlu0 %v191
      %v264 = vpop.xlane.xlu0 %263
      %v265 = vadd.f32 %v259, %v262
      %v266 = vadd.f32 %v260, %v264
      %267 = vst.msk [vmem:[#allocation4] sm:$0xff] %vm192, %v265
      %268 = vst.msk [vmem:[#allocation4 + $0x8] sm:$0xff] %vm192, %v266
      %v269 = vld [vmem:[#allocation5] sm:$0xff]
      %v270 = vld [vmem:[#allocation5 + $0x8] sm:$0xff]
      %v271 = vmul.f32 %v160, %v137
      %v272 = vmul.f32 %v161, %v142
      %273 = vadd.xlane.f32.xlu0 %v271
      %v274 = vpop.xlane.xlu0 %273
      %275 = vadd.xlane.f32.xlu0 %v272
      %v276 = vpop.xlane.xlu0 %275
      %v277 = vadd.f32 %v269, %v274
      %v278 = vadd.f32 %v270, %v276
      %279 = vst.msk [vmem:[#allocation5] sm:$0xff] %vm192, %v277
      %280 = vst.msk [vmem:[#allocation5 + $0x8] sm:$0xff] %vm192, %v278
      %v281 = vld [vmem:[#allocation6] sm:$0xff]
      %v282 = vld [vmem:[#allocation6 + $0x8] sm:$0xff]
      %283 = vadd.xlane.f32.xlu0 %v160
      %v284 = vpop.xlane.xlu0 %283
      %285 = vadd.xlane.f32.xlu0 %v161
      %v286 = vpop.xlane.xlu0 %285
      %v287 = vadd.f32 %v281, %v284
      %v288 = vadd.f32 %v282, %v286
      %289 = vst.msk [vmem:[#allocation6] sm:$0xff] %vm192, %v287
      %290 = vst.msk [vmem:[#allocation6 + $0x8] sm:$0xff] %vm192, %v288
    $region33: #{tpu_custom_call.1} parent=1 // pred_fallthru
      _
    // Predicated region
    $region34: #{tpu_custom_call.1} parent=1 // pred_check
      %p291 = pneg %p31
    $region35: #{tpu_custom_call.1} parent=1 // pred_check_branch
      %293 = sbr.rel (%p291) target = $region37
    $region36: #{tpu_custom_call.1} parent=1 // pred_region
      %v294 = vld [vmem:[#allocation3] sm:$0xff]
      %v295 = vld [vmem:[#allocation3 + $0x8] sm:$0xff]
      %v296 = vld [vmem:[#allocation4] sm:$0xff]
      %v297 = vld [vmem:[#allocation4 + $0x8] sm:$0xff]
      %v298 = vsub.f32 0.0, %v294
      %v299 = vsub.f32 0.0, %v295
      %v300 = vmul.f32 %v298, 1.442695
      %v301 = vpow.pop %v300
      %v302 = vmul.f32 %v299, 1.442695
      %v303 = vpow.pop %v302
      %v304 = vmul.f32 %v301, 112.0
      %v305 = vmul.f32 %v303, 112.0
      %v306 = vsub.f32 %v296, %v304
      %v307 = vsub.f32 %v297, %v305
      %v308 = vld [vmem:[#allocation5] sm:$0xff]
      %v309 = vld [vmem:[#allocation5 + $0x8] sm:$0xff]
      %v310 = vld [vmem:[#allocation6] sm:$0xff]
      %v311 = vld [vmem:[#allocation6 + $0x8] sm:$0xff]
      %v312 = vrcp.pop %v310
      %v313 = vmul.f32 %v308, %v312
      %v314 = vrcp.pop %v311
      %v315 = vmul.f32 %v309, %v314
      %v316 = vsub.f32 %v313, %v294
      %v317 = vsub.f32 %v315, %v295
      %v318 = vlog2.pop %v306
      %v319 = vmul.f32 %v318, 0.6931472
      %v320 = vlog2.pop %v307
      %v321 = vmul.f32 %v320, 0.6931472
      %v322 = vsub.f32 %v316, %v319
      %v323 = vsub.f32 %v317, %v321
      %v324 = vmul.f32 %v322, -1.0
      %v325 = vmul.f32 %v323, -1.0
      %326 = vst.msk [vmem:[%s4] sm:$0xff] %vm192, %v324
      %327 = vst.msk [vmem:[%s4 + $0x8] sm:$0xff] %vm192, %v325
    $region37: #{tpu_custom_call.1} parent=1 // pred_fallthru
      _
    // Predicated region
    $region38: #{tpu_custom_call.1} parent=1 // pred_check
      _
    $region39: #{tpu_custom_call.1} parent=1 // pred_check_branch
      %329 = sbr.rel (0) target = $region41
    $region40: #{tpu_custom_call.1} parent=1 // pred_region
      _
    $region41: #{tpu_custom_call.1} parent=1 // pred_fallthru
      _
    // Predicated region
    $region42: #{tpu_custom_call.1} parent=1 // pred_check
      _
    $region43: #{tpu_custom_call.1} parent=1 // pred_check_branch
      %331 = sbr.rel (0) target = $region45
    $region44: #{tpu_custom_call.1} parent=1 // pred_region
      _
    $region45: #{tpu_custom_call.1} parent=1 // pred_fallthru
      _
    %332 = vsyncpa [#allocation8], 1

</llo_original>
